<compile_context>
chip_gen: v7x
topology: tpu7x:2x2x1
jax: 0.10.0
libtpu: 0.0.40
codegen_flags: <defaults>
</compile_context>

<pallas_src>
import math

import jax
import jax.numpy as jnp
from jax.experimental import pallas as pl
from jax.experimental.pallas import tpu as pltpu


def critic_kernel(x_ref, w1_ref, b1_ref, w2_ref, b2_ref, w3_ref, b3_ref, out_ref):
    x = x_ref[...]                                                     # (S, TB)
    # fc1 + relu : (64, S) @ (S, TB) -> (64, TB)
    h1 = jnp.dot(w1_ref[...], x, preferred_element_type=jnp.float32)
    h1 = jnp.maximum(h1 + b1_ref[...], 0.0)
    # fc2 + relu : (64, 64) @ (64, TB) -> (64, TB)
    h2 = jnp.dot(w2_ref[...], h1, preferred_element_type=jnp.float32)
    h2 = jnp.maximum(h2 + b2_ref[...], 0.0)
    # fc_out : 64 -> 1 done on VPU (elementwise mul) + XLU (sublane reduce),
    # avoiding a degenerate M=1 MXU pass.  w3 is (64, 1) broadcast over TB lanes.
    v = jnp.sum(h2 * w3_ref[...], axis=0, keepdims=True)               # (1, TB)
    out_ref[...] = (v + b3_ref[...]).astype(out_ref.dtype)


def critic_forward(x, params, *, batch_tile=None):
    """x: (B, state_dim) float32. Returns (B, 1) float32."""
    w1, b1, w2, b2, w3, b3 = params
    B, S = x.shape
    H = w1.shape[0]

    # Pick a lane-dense batch tile (multiple of 128); larger tiles amortize the
    # ~0.35us/grid-step overhead, but keep them modest so double-buffered x/out
    # easily fits v7x's 64 MiB VMEM.
    if batch_tile is None:
        batch_tile = 1024 if B >= 1024 else 128
    tb = batch_tile
    bp = ((B + tb - 1) // tb) * tb                  # padded batch (static)
    num_tiles = bp // tb

    # Transpose so batch is the lane axis and pad batch up to a tile multiple.
    # (S, B) pads sublanes 7->8 instead of lanes 7->128 for the streamed operand.
    xt = jnp.pad(x.T, ((0, 0), (0, bp - B)))        # (S, bp)

    flops = 2 * B * (S * H + H * H + H)
    bytes_accessed = 4 * (B * S + B + H * S + H * H + H + H + H + 1)

    out_t = pl.pallas_call(
        critic_kernel,
        out_shape=jax.ShapeDtypeStruct((1, bp), jnp.float32),
        grid=(num_tiles,),
        in_specs=[
            pl.BlockSpec((S, tb), lambda i: (0, i)),     # x: streamed over batch
            pl.BlockSpec((H, S), lambda i: (0, 0)),      # w1: VMEM-resident
            pl.BlockSpec((H, 1), lambda i: (0, 0)),      # b1
            pl.BlockSpec((H, H), lambda i: (0, 0)),      # w2
            pl.BlockSpec((H, 1), lambda i: (0, 0)),      # b2
            pl.BlockSpec((H, 1), lambda i: (0, 0)),      # w3 (stored as column)
            pl.BlockSpec((1, 1), lambda i: (0, 0)),      # b3
        ],
        out_specs=pl.BlockSpec((1, tb), lambda i: (0, i)),   # lane-dense output
        compiler_params=pltpu.CompilerParams(
            dimension_semantics=("parallel",),               # v7x: shard over 2 TCs
        ),
        cost_estimate=pl.CostEstimate(
            flops=flops, transcendentals=0, bytes_accessed=bytes_accessed),
    )(xt, w1, b1, w2, b2, w3, b3)

    # (1, bp) -> (B, 1)
    return out_t[:, :B].T


def init_critic_params(key, state_dim):
    """Deterministic init mirroring PyTorch nn.Linear defaults
    (uniform(-1/sqrt(fan_in), 1/sqrt(fan_in)) for both weight and bias).
    Weights stored (out_features, in_features) like PyTorch; biases as columns."""
    def linear(key, fan_in, fan_out):
        kw, kb = jax.random.split(key)
        bound = 1.0 / math.sqrt(fan_in)
        w = jax.random.uniform(kw, (fan_out, fan_in), jnp.float32, -bound, bound)
        b = jax.random.uniform(kb, (fan_out, 1), jnp.float32, -bound, bound)
        return w, b

    k1, k2, k3 = jax.random.split(key, 3)
    w1, b1 = linear(k1, state_dim, 64)       # (64, S), (64, 1)
    w2, b2 = linear(k2, 64, 64)              # (64, 64), (64, 1)
    w3_row, b3 = linear(k3, 64, 1)           # (1, 64), (1, 1)
    w3 = w3_row.T                            # store as (64, 1) column for the kernel
    return (w1, b1, w2, b2, w3, b3)


def critic_reference(x, params):
    w1, b1, w2, b2, w3, b3 = params
    h1 = jnp.maximum(x @ w1.T + b1.T, 0.0)
    h2 = jnp.maximum(h1 @ w2.T + b2.T, 0.0)
    return h2 @ w3 + b3


if __name__ == "__main__":
    state_dim = 7

    key = jax.random.PRNGKey(0)
    kx, kp, kx2 = jax.random.split(key, 3)
    params = init_critic_params(kp, state_dim)

    # Small test (module-scale batch).
    batch = 8
    x = jax.random.normal(kx, (batch, state_dim), jnp.float32)
    value = jax.block_until_ready(critic_forward(x, params))
    ref = critic_reference(x, params)
    assert value.shape == (batch, 1), value.shape
    assert jnp.allclose(value, ref, atol=1e-5, rtol=1e-5)

    # Larger, non-multiple-of-tile batch to exercise the grid + padding path.
    batch2 = 300
    x2 = jax.random.normal(kx2, (batch2, state_dim), jnp.float32)
    value2 = jax.block_until_ready(critic_forward(x2, params))
    ref2 = critic_reference(x2, params)
    assert value2.shape == (batch2, 1), value2.shape
    assert jnp.allclose(value2, ref2, atol=1e-5, rtol=1e-5)

    print("KERNEL_OK")
</pallas_src>

<mosaic_0001>
module attributes {stable_mosaic.version = 11 : i64} {
  func.func @critic_kernel(%arg0: i32, %arg1: memref<7x128xf32, #tpu.memory_space<vmem>>, %arg2: memref<64x7xf32, #tpu.memory_space<vmem>>, %arg3: memref<64x1xf32, #tpu.memory_space<vmem>>, %arg4: memref<64x64xf32, #tpu.memory_space<vmem>>, %arg5: memref<64x1xf32, #tpu.memory_space<vmem>>, %arg6: memref<64x1xf32, #tpu.memory_space<vmem>>, %arg7: memref<1x1xf32, #tpu.memory_space<vmem>>, %arg8: memref<1x128xf32, #tpu.memory_space<vmem>>) attributes {dimension_semantics = [#tpu.dimension_semantics<parallel>], iteration_bounds = array<i64: 1>, scalar_prefetch = 0 : i64, scratch_operands = 0 : i64, tpu.core_type = #tpu.core_type<tc>, window_params = [{transform_indices = @transform_0, window_bounds = array<i64: 7, 128>}, {pipeline_mode = #tpu.pipeline_mode<synchronous>, transform_indices = @transform_1, window_bounds = array<i64: 64, 7>}, {pipeline_mode = #tpu.pipeline_mode<synchronous>, transform_indices = @transform_2, window_bounds = array<i64: 64, 1>}, {pipeline_mode = #tpu.pipeline_mode<synchronous>, transform_indices = @transform_3, window_bounds = array<i64: 64, 64>}, {pipeline_mode = #tpu.pipeline_mode<synchronous>, transform_indices = @transform_4, window_bounds = array<i64: 64, 1>}, {pipeline_mode = #tpu.pipeline_mode<synchronous>, transform_indices = @transform_5, window_bounds = array<i64: 64, 1>}, {pipeline_mode = #tpu.pipeline_mode<synchronous>, transform_indices = @transform_6, window_bounds = array<i64: 1, 1>}, {transform_indices = @transform_7, window_bounds = array<i64: 1, 128>}]} {
    %c0 = arith.constant 0 : index
    %c0_0 = arith.constant 0 : index
    %0 = vector.load %arg1[%c0, %c0_0] : memref<7x128xf32, #tpu.memory_space<vmem>>, vector<7x128xf32>
    %c0_1 = arith.constant 0 : index
    %c0_2 = arith.constant 0 : index
    %1 = vector.load %arg2[%c0_1, %c0_2] : memref<64x7xf32, #tpu.memory_space<vmem>>, vector<64x7xf32>
    %cst = arith.constant dense<0.000000e+00> : vector<64x128xf32>
    %2 = tpu.matmul %1, %0, %cst {dimension_numbers = #tpu.dot_dimension_numbers<[1], [0], [0], [1], [0, 0, 1, 1], [], []>} : vector<64x7xf32>, vector<7x128xf32>, vector<64x128xf32> -> vector<64x128xf32>
    %c0_3 = arith.constant 0 : index
    %c0_4 = arith.constant 0 : index
    %3 = vector.load %arg3[%c0_3, %c0_4] : memref<64x1xf32, #tpu.memory_space<vmem>>, vector<64x1xf32>
    %4 = vector.broadcast %3 : vector<64x1xf32> to vector<64x128xf32>
    %5 = arith.addf %2, %4 : vector<64x128xf32>
    %cst_5 = arith.constant 0.000000e+00 : f32
    %6 = vector.broadcast %cst_5 : f32 to vector<64x128xf32>
    %7 = arith.maximumf %5, %6 : vector<64x128xf32>
    %c0_6 = arith.constant 0 : index
    %c0_7 = arith.constant 0 : index
    %8 = vector.load %arg4[%c0_6, %c0_7] : memref<64x64xf32, #tpu.memory_space<vmem>>, vector<64x64xf32>
    %cst_8 = arith.constant dense<0.000000e+00> : vector<64x128xf32>
    %9 = tpu.matmul %8, %7, %cst_8 {dimension_numbers = #tpu.dot_dimension_numbers<[1], [0], [0], [1], [0, 0, 1, 1], [], []>} : vector<64x64xf32>, vector<64x128xf32>, vector<64x128xf32> -> vector<64x128xf32>
    %c0_9 = arith.constant 0 : index
    %c0_10 = arith.constant 0 : index
    %10 = vector.load %arg5[%c0_9, %c0_10] : memref<64x1xf32, #tpu.memory_space<vmem>>, vector<64x1xf32>
    %11 = vector.broadcast %10 : vector<64x1xf32> to vector<64x128xf32>
    %12 = arith.addf %9, %11 : vector<64x128xf32>
    %cst_11 = arith.constant 0.000000e+00 : f32
    %13 = vector.broadcast %cst_11 : f32 to vector<64x128xf32>
    %14 = arith.maximumf %12, %13 : vector<64x128xf32>
    %c0_12 = arith.constant 0 : index
    %c0_13 = arith.constant 0 : index
    %15 = vector.load %arg6[%c0_12, %c0_13] : memref<64x1xf32, #tpu.memory_space<vmem>>, vector<64x1xf32>
    %16 = vector.broadcast %15 : vector<64x1xf32> to vector<64x128xf32>
    %17 = arith.mulf %14, %16 : vector<64x128xf32>
    %cst_14 = arith.constant dense<0.000000e+00> : vector<128xf32>
    %18 = vector.multi_reduction <add>, %17, %cst_14 [0] : vector<64x128xf32> to vector<128xf32>
    %19 = vector.shape_cast %18 : vector<128xf32> to vector<1x128xf32>
    %c0_15 = arith.constant 0 : index
    %c0_16 = arith.constant 0 : index
    %20 = vector.load %arg7[%c0_15, %c0_16] : memref<1x1xf32, #tpu.memory_space<vmem>>, vector<1x1xf32>
    %21 = vector.broadcast %20 : vector<1x1xf32> to vector<1x128xf32>
    %22 = arith.addf %19, %21 : vector<1x128xf32>
    %c0_17 = arith.constant 0 : index
    %c0_18 = arith.constant 0 : index
    %23 = vector.load %arg8[%c0_17, %c0_18] : memref<1x128xf32, #tpu.memory_space<vmem>>, vector<1x128xf32>
    tpu.vector_store %arg8[%c0_17, %c0_18], %22 {strides = array<i32>} : memref<1x128xf32, #tpu.memory_space<vmem>>, vector<1x128xf32>,
    return
  }
  func.func @transform_0(%arg0: i32) -> (i32, i32) {
    %c0_i32 = arith.constant 0 : i32
    %c0_i32_0 = arith.constant 0 : i32
    return %c0_i32, %arg0 : i32, i32
  }
  func.func @transform_1(%arg0: i32) -> (i32, i32) {
    %c0_i32 = arith.constant 0 : i32
    %c0_i32_0 = arith.constant 0 : i32
    %c0_i32_1 = arith.constant 0 : i32
    return %c0_i32, %c0_i32_0 : i32, i32
  }
  func.func @transform_2(%arg0: i32) -> (i32, i32) {
    %c0_i32 = arith.constant 0 : i32
    %c0_i32_0 = arith.constant 0 : i32
    %c0_i32_1 = arith.constant 0 : i32
    return %c0_i32, %c0_i32_0 : i32, i32
  }
  func.func @transform_3(%arg0: i32) -> (i32, i32) {
    %c0_i32 = arith.constant 0 : i32
    %c0_i32_0 = arith.constant 0 : i32
    %c0_i32_1 = arith.constant 0 : i32
    return %c0_i32, %c0_i32_0 : i32, i32
  }
  func.func @transform_4(%arg0: i32) -> (i32, i32) {
    %c0_i32 = arith.constant 0 : i32
    %c0_i32_0 = arith.constant 0 : i32
    %c0_i32_1 = arith.constant 0 : i32
    return %c0_i32, %c0_i32_0 : i32, i32
  }
  func.func @transform_5(%arg0: i32) -> (i32, i32) {
    %c0_i32 = arith.constant 0 : i32
    %c0_i32_0 = arith.constant 0 : i32
    %c0_i32_1 = arith.constant 0 : i32
    return %c0_i32, %c0_i32_0 : i32, i32
  }
  func.func @transform_6(%arg0: i32) -> (i32, i32) {
    %c0_i32 = arith.constant 0 : i32
    %c0_i32_0 = arith.constant 0 : i32
    %c0_i32_1 = arith.constant 0 : i32
    return %c0_i32, %c0_i32_0 : i32, i32
  }
  func.func @transform_7(%arg0: i32) -> (i32, i32) {
    %c0_i32 = arith.constant 0 : i32
    %c0_i32_0 = arith.constant 0 : i32
    return %c0_i32, %arg0 : i32, i32
  }
}

</mosaic_0001>

<llo_original>
// kernel: tpu_custom_call.1
$region0: #{tpu_custom_call.1}
  #allocation0 [shape = 'u32[]', space=smem, size = 0x4, offset = 0x4, fixed_abs, tag = 'smem constant byte address 0x4 - core index']
  #allocation1 [shape = 'u32[144,128]{1,0:T(1,128)}', space=vmem, size = 0x12000, scoped, tag = 'internal scratch']
  #allocation2 [shape = 'f32[1,1]{1,0:T(1,128)S(1)}', space=vmem, size = 0x200, scoped, tag = 'scoped memory for tpu_custom_call.1']
  %s0 = inlined_call_operand.vmem [shape: f32[7,128], index: 0, kind: input, shape index: {}]
  %s1 = inlined_call_operand.vmem [shape: f32[64,7], index: 1, kind: input, shape index: {}]
  %s2 = inlined_call_operand.vmem [shape: f32[64,1], index: 2, kind: input, shape index: {}]
  %s3 = inlined_call_operand.vmem [shape: f32[64,64], index: 3, kind: input, shape index: {}]
  %s4 = inlined_call_operand.vmem [shape: f32[64,1], index: 4, kind: input, shape index: {}]
  %s5 = inlined_call_operand.vmem [shape: f32[64,1], index: 5, kind: input, shape index: {}]
  %s6 = inlined_call_operand.<no memory space> [shape: f32[1,1], index: 6, kind: input, shape index: {}]
  %s7 = inlined_call_operand.hbm [shape: f32[1,128], index: 7, kind: output, shape index: {}]
  %s8 = sld [smem:[#allocation0]]
  $region38: #{tpu_custom_call.1} parent=0
    _
  %s10 = ssub.s32 1, %s8
  %s11 = scalar_select 0, %s10, %s8
  %v12 = vstv %s6
  %13 = vst [vmem:[#allocation2] sm:$0x1] %v12
  $region1: #{tpu_custom_call.1} parent=0
    #allocation3 [shape = 'u8[512]{0}', space=vmem, size = 0x400, scoped, tag = 'output window, operand 0, single buffered']
    #allocation4 [shape = 's32[1]{0}', space=sflag, size = 0x4, scoped, tag = 'scoped memory for tpu_custom_call.1']
    %14 = vsyncpa [#allocation4], 0
    // Predicated region
    $region2: #{tpu_custom_call.1} parent=1 // pred_check
      _
    $region3: #{tpu_custom_call.1} parent=1 // pred_check_branch
      %16 = sbr.rel (0) target = $region5
    $region4: #{tpu_custom_call.1} parent=1 // pred_region
      _
    $region5: #{tpu_custom_call.1} parent=1 // pred_fallthru
      _
    // Predicated region
    $region6: #{tpu_custom_call.1} parent=1 // pred_check
      _
    $region7: #{tpu_custom_call.1} parent=1 // pred_check_branch
      %18 = sbr.rel (0) target = $region9
    $region8: #{tpu_custom_call.1} parent=1 // pred_region
      _
    $region9: #{tpu_custom_call.1} parent=1 // pred_fallthru
      _
    // Predicated region
    $region10: #{tpu_custom_call.1} parent=1 // pred_check
      _
    $region11: #{tpu_custom_call.1} parent=1 // pred_check_branch
      %20 = sbr.rel (0) target = $region13
    $region12: #{tpu_custom_call.1} parent=1 // pred_region
      _
    $region13: #{tpu_custom_call.1} parent=1 // pred_fallthru
      _
    // Predicated region
    $region14: #{tpu_custom_call.1} parent=1 // pred_check
      _
    $region15: #{tpu_custom_call.1} parent=1 // pred_check_branch
      %22 = sbr.rel (0) target = $region17
    $region16: #{tpu_custom_call.1} parent=1 // pred_region
      _
    $region17: #{tpu_custom_call.1} parent=1 // pred_fallthru
      _
    // Predicated region
    $region18: #{tpu_custom_call.1} parent=1 // pred_check
      _
    $region19: #{tpu_custom_call.1} parent=1 // pred_check_branch
      %24 = sbr.rel (0) target = $region21
    $region20: #{tpu_custom_call.1} parent=1 // pred_region
      _
    $region21: #{tpu_custom_call.1} parent=1 // pred_fallthru
      _
    // Predicated region
    $region22: #{tpu_custom_call.1} parent=1 // pred_check
      _
    $region23: #{tpu_custom_call.1} parent=1 // pred_check_branch
      %26 = sbr.rel (0) target = $region25
    $region24: #{tpu_custom_call.1} parent=1 // pred_region
      _
    $region25: #{tpu_custom_call.1} parent=1 // pred_fallthru
      _
    // Predicated region
    $region26: #{tpu_custom_call.1} parent=1 // pred_check
      _
    $region27: #{tpu_custom_call.1} parent=1 // pred_check_branch
      %28 = sbr.rel (0) target = $region29
    $region28: #{tpu_custom_call.1} parent=1 // pred_region
      _
    $region29: #{tpu_custom_call.1} parent=1 // pred_fallthru
      _
    %v29 = vld [vmem:[%s0] sm:$0x7f]
    %v30 = vld [vmem:[%s1] sm:$0xff]
    %v31 = vld [vmem:[%s1 + $0x8] sm:$0xff]
    %v32 = vld [vmem:[%s1 + $0x10] sm:$0xff]
    %v33 = vld [vmem:[%s1 + $0x18] sm:$0xff]
    %v34 = vld [vmem:[%s1 + $0x20] sm:$0xff]
    %v35 = vld [vmem:[%s1 + $0x28] sm:$0xff]
    %v36 = vld [vmem:[%s1 + $0x30] sm:$0xff]
    %v37 = vld [vmem:[%s1 + $0x38] sm:$0xff]
    %v38 = vld [vmem:[%s2] sm:$0xff]
    %v39 = vld [vmem:[%s2 + $0x8] sm:$0xff]
    %v40 = vld [vmem:[%s2 + $0x10] sm:$0xff]
    %v41 = vld [vmem:[%s2 + $0x18] sm:$0xff]
    %v42 = vld [vmem:[%s2 + $0x20] sm:$0xff]
    %v43 = vld [vmem:[%s2 + $0x28] sm:$0xff]
    %v44 = vld [vmem:[%s2 + $0x30] sm:$0xff]
    %v45 = vld [vmem:[%s2 + $0x38] sm:$0xff]
    %47 = vset.pattern.permute.xlu0 0
    %48 = vperm.xlu0 %47, %v38
    %v49 = vpop.permute.xlu0 %48
    %52 = vset.pattern.permute.xlu0 0
    %53 = vperm.xlu0 %52, %v39
    %v54 = vpop.permute.xlu0 %53
    %57 = vset.pattern.permute.xlu0 0
    %58 = vperm.xlu0 %57, %v40
    %v59 = vpop.permute.xlu0 %58
    %62 = vset.pattern.permute.xlu0 0
    %63 = vperm.xlu0 %62, %v41
    %v64 = vpop.permute.xlu0 %63
    %67 = vset.pattern.permute.xlu0 0
    %68 = vperm.xlu0 %67, %v42
    %v69 = vpop.permute.xlu0 %68
    %72 = vset.pattern.permute.xlu0 0
    %73 = vperm.xlu0 %72, %v43
    %v74 = vpop.permute.xlu0 %73
    %77 = vset.pattern.permute.xlu0 0
    %78 = vperm.xlu0 %77, %v44
    %v79 = vpop.permute.xlu0 %78
    %82 = vset.pattern.permute.xlu0 0
    %83 = vperm.xlu0 %82, %v45
    %v84 = vpop.permute.xlu0 %83
    %vm86 = vcmask 56320
    %v88 = vsel %vm86, %v30, 0
    %v91 = vsel %vm86, %v31, 0
    %v94 = vsel %vm86, %v32, 0
    %v97 = vsel %vm86, %v33, 0
    %v100 = vsel %vm86, %v34, 0
    %v103 = vsel %vm86, %v35, 0
    %v106 = vsel %vm86, %v36, 0
    %v109 = vsel %vm86, %v37, 0
    %vm111 = vcmask 1046528
    %v113 = vsel %vm111, %v29, 0
    %115 = vmatprep.subr.mxu0 0.0
    %116 = vmatpush1.msra.mxu0 %v113
    %117 = vmatprep.subr.mxu0 0.0
    %118 = vmatpush1.msra.mxu0 0.0
    %119 = vmatprep.subr.mxu0 0.0
    %120 = vmatpush1.msra.mxu0 0.0
    %121 = vmatprep.subr.mxu0 0.0
    %122 = vmatpush1.msra.mxu0 0.0
    %123 = vmatprep.subr.mxu0 0.0
    %124 = vmatpush1.msra.mxu0 0.0
    %125 = vmatprep.subr.mxu0 0.0
    %126 = vmatpush1.msra.mxu0 0.0
    %127 = vmatprep.subr.mxu0 0.0
    %128 = vmatpush1.msra.mxu0 0.0
    %129 = vmatprep.subr.mxu0 0.0
    %130 = vmatpush1.msra.mxu0 0.0
    %131 = vmatprep.subr.mxu0 0.0
    %132 = vmatpush1.msra.mxu0 0.0
    %133 = vmatprep.subr.mxu0 0.0
    %134 = vmatpush1.msra.mxu0 0.0
    %135 = vmatprep.subr.mxu0 0.0
    %136 = vmatpush1.msra.mxu0 0.0
    %137 = vmatprep.subr.mxu0 0.0
    %138 = vmatpush1.msra.mxu0 0.0
    %139 = vmatprep.subr.mxu0 0.0
    %140 = vmatpush1.msra.mxu0 0.0
    %141 = vmatprep.subr.mxu0 0.0
    %142 = vmatpush1.msra.mxu0 0.0
    %143 = vmatprep.subr.mxu0 0.0
    %144 = vmatpush1.msra.mxu0 0.0
    %145 = vmatprep.subr.mxu0 0.0
    %146 = vmatpush1.msra.mxu0 0.0
    %147 = vmatprep.subr.mxu0 0.0
    %148 = vmatpush1.msra.mxu0 0.0
    %149 = vmatprep.subr.mxu0 0.0
    %150 = vmatpush1.msra.mxu0 0.0
    %151 = vmatprep.subr.mxu0 0.0
    %152 = vmatpush1.msra.mxu0 0.0
    %153 = vmatprep.subr.mxu0 0.0
    %154 = vmatpush1.msra.mxu0 0.0
    %155 = vmatprep.subr.mxu0 0.0
    %156 = vmatpush1.msra.mxu0 0.0
    %157 = vmatprep.subr.mxu0 0.0
    %158 = vmatpush1.msra.mxu0 0.0
    %159 = vmatprep.subr.mxu0 0.0
    %160 = vmatpush1.msra.mxu0 0.0
    %161 = vmatprep.subr.mxu0 0.0
    %162 = vmatpush1.msra.mxu0 0.0
    %163 = vmatprep.subr.mxu0 0.0
    %164 = vmatpush1.msra.mxu0 0.0
    %165 = vmatprep.subr.mxu0 0.0
    %166 = vmatpush1.msra.mxu0 0.0
    %167 = vmatprep.subr.mxu0 0.0
    %168 = vmatpush1.msra.mxu0 0.0
    %169 = vmatprep.subr.mxu0 0.0
    %170 = vmatpush1.msra.mxu0 0.0
    %171 = vmatprep.subr.mxu0 0.0
    %172 = vmatpush1.msra.mxu0 0.0
    %173 = vmatprep.subr.mxu0 0.0
    %174 = vmatpush1.msra.mxu0 0.0
    %175 = vmatprep.subr.mxu0 0.0
    %176 = vmatpush1.msra.mxu0 0.0
    %177 = vmatprep.subr.mxu0 0.0
    %178 = vmatpush1.msra.mxu0 0.0
    %179 = vmatprep.mubr.f32.mxu0 0.0
    %180 = vmatmul.mubr.f32.gmra.mrb[0].mxu0 %v88
    %v181 = vpop.f32.mrb[0].mxu0
    %v182 = vadd.f32 %v49, %v181
    %v183 = vpop.f32.mrb[0].mxu0
    %184 = vmatprep.mubr.f32.mxu0 0.0
    %185 = vmatmul.mubr.f32.gmra.mrb[0].mxu0 %v91
    %v186 = vpop.f32.mrb[0].mxu0
    %v187 = vadd.f32 %v54, %v186
    %v188 = vpop.f32.mrb[0].mxu0
    %189 = vmatprep.mubr.f32.mxu0 0.0
    %190 = vmatmul.mubr.f32.gmra.mrb[0].mxu0 %v94
    %v191 = vpop.f32.mrb[0].mxu0
    %v192 = vadd.f32 %v59, %v191
    %v193 = vpop.f32.mrb[0].mxu0
    %194 = vmatprep.mubr.f32.mxu0 0.0
    %195 = vmatmul.mubr.f32.gmra.mrb[0].mxu0 %v97
    %v196 = vpop.f32.mrb[0].mxu0
    %v197 = vadd.f32 %v64, %v196
    %v198 = vpop.f32.mrb[0].mxu0
    %199 = vmatprep.mubr.f32.mxu0 0.0
    %200 = vmatmul.mubr.f32.gmra.mrb[0].mxu0 %v100
    %v201 = vpop.f32.mrb[0].mxu0
    %v202 = vadd.f32 %v69, %v201
    %v203 = vpop.f32.mrb[0].mxu0
    %204 = vmatprep.mubr.f32.mxu0 0.0
    %205 = vmatmul.mubr.f32.gmra.mrb[0].mxu0 %v103
    %v206 = vpop.f32.mrb[0].mxu0
    %v207 = vadd.f32 %v74, %v206
    %v208 = vpop.f32.mrb[0].mxu0
    %209 = vmatprep.mubr.f32.mxu0 0.0
    %210 = vmatmul.mubr.f32.gmra.mrb[0].mxu0 %v106
    %v211 = vpop.f32.mrb[0].mxu0
    %v212 = vadd.f32 %v79, %v211
    %v213 = vpop.f32.mrb[0].mxu0
    %214 = vmatprep.mubr.f32.mxu0 0.0
    %215 = vmatmul.mubr.f32.gmra.mrb[0].mxu0 %v109
    %v216 = vpop.f32.mrb[0].mxu0
    %v217 = vadd.f32 %v84, %v216
    %v218 = vpop.f32.mrb[0].mxu0
    %219 = vdwg.mxu0
    %v220 = vmax.f32 %v182, 0.0
    %v221 = vmax.f32 %v187, 0.0
    %v222 = vmax.f32 %v192, 0.0
    %v223 = vmax.f32 %v197, 0.0
    %v224 = vmax.f32 %v202, 0.0
    %v225 = vmax.f32 %v207, 0.0
    %v226 = vmax.f32 %v212, 0.0
    %v227 = vmax.f32 %v217, 0.0
    %v228 = vld [vmem:[%s3] sm:$0xff]
    %v229 = vld [vmem:[%s3 + $0x8] sm:$0xff]
    %v230 = vld [vmem:[%s3 + $0x10] sm:$0xff]
    %v231 = vld [vmem:[%s3 + $0x18] sm:$0xff]
    %v232 = vld [vmem:[%s3 + $0x20] sm:$0xff]
    %v233 = vld [vmem:[%s3 + $0x28] sm:$0xff]
    %v234 = vld [vmem:[%s3 + $0x30] sm:$0xff]
    %v235 = vld [vmem:[%s3 + $0x38] sm:$0xff]
    %v236 = vld [vmem:[%s4] sm:$0xff]
    %v237 = vld [vmem:[%s4 + $0x8] sm:$0xff]
    %v238 = vld [vmem:[%s4 + $0x10] sm:$0xff]
    %v239 = vld [vmem:[%s4 + $0x18] sm:$0xff]
    %v240 = vld [vmem:[%s4 + $0x20] sm:$0xff]
    %v241 = vld [vmem:[%s4 + $0x28] sm:$0xff]
    %v242 = vld [vmem:[%s4 + $0x30] sm:$0xff]
    %v243 = vld [vmem:[%s4 + $0x38] sm:$0xff]
    %245 = vset.pattern.permute.xlu0 0
    %246 = vperm.xlu0 %245, %v236
    %v247 = vpop.permute.xlu0 %246
    %250 = vset.pattern.permute.xlu0 0
    %251 = vperm.xlu0 %250, %v237
    %v252 = vpop.permute.xlu0 %251
    %255 = vset.pattern.permute.xlu0 0
    %256 = vperm.xlu0 %255, %v238
    %v257 = vpop.permute.xlu0 %256
    %260 = vset.pattern.permute.xlu0 0
    %261 = vperm.xlu0 %260, %v239
    %v262 = vpop.permute.xlu0 %261
    %265 = vset.pattern.permute.xlu0 0
    %266 = vperm.xlu0 %265, %v240
    %v267 = vpop.permute.xlu0 %266
    %270 = vset.pattern.permute.xlu0 0
    %271 = vperm.xlu0 %270, %v241
    %v272 = vpop.permute.xlu0 %271
    %275 = vset.pattern.permute.xlu0 0
    %276 = vperm.xlu0 %275, %v242
    %v277 = vpop.permute.xlu0 %276
    %280 = vset.pattern.permute.xlu0 0
    %281 = vperm.xlu0 %280, %v243
    %v282 = vpop.permute.xlu0 %281
    %vm284 = vcmask 523264
    %v286 = vsel %vm284, %v228, 0
    %v289 = vsel %vm284, %v229, 0
    %v292 = vsel %vm284, %v230, 0
    %v295 = vsel %vm284, %v231, 0
    %v298 = vsel %vm284, %v232, 0
    %v301 = vsel %vm284, %v233, 0
    %v304 = vsel %vm284, %v234, 0
    %v307 = vsel %vm284, %v235, 0
    %309 = vmatprep.subr.mxu0 0.0
    %310 = vmatpush1.msra.mxu0 %v220
    %311 = vmatprep.subr.mxu0 0.0
    %312 = vmatpush1.msra.mxu0 %v221
    %313 = vmatprep.subr.mxu0 0.0
    %314 = vmatpush1.msra.mxu0 %v222
    %315 = vmatprep.subr.mxu0 0.0
    %316 = vmatpush1.msra.mxu0 %v223
    %317 = vmatprep.subr.mxu0 0.0
    %318 = vmatpush1.msra.mxu0 %v224
    %319 = vmatprep.subr.mxu0 0.0
    %320 = vmatpush1.msra.mxu0 %v225
    %321 = vmatprep.subr.mxu0 0.0
    %322 = vmatpush1.msra.mxu0 %v226
    %323 = vmatprep.subr.mxu0 0.0
    %324 = vmatpush1.msra.mxu0 %v227
    %325 = vmatprep.subr.mxu0 0.0
    %326 = vmatpush1.msra.mxu0 0.0
    %327 = vmatprep.subr.mxu0 0.0
    %328 = vmatpush1.msra.mxu0 0.0
    %329 = vmatprep.subr.mxu0 0.0
    %330 = vmatpush1.msra.mxu0 0.0
    %331 = vmatprep.subr.mxu0 0.0
    %332 = vmatpush1.msra.mxu0 0.0
    %333 = vmatprep.subr.mxu0 0.0
    %334 = vmatpush1.msra.mxu0 0.0
    %335 = vmatprep.subr.mxu0 0.0
    %336 = vmatpush1.msra.mxu0 0.0
    %337 = vmatprep.subr.mxu0 0.0
    %338 = vmatpush1.msra.mxu0 0.0
    %339 = vmatprep.subr.mxu0 0.0
    %340 = vmatpush1.msra.mxu0 0.0
    %341 = vmatprep.subr.mxu0 0.0
    %342 = vmatpush1.msra.mxu0 0.0
    %343 = vmatprep.subr.mxu0 0.0
    %344 = vmatpush1.msra.mxu0 0.0
    %345 = vmatprep.subr.mxu0 0.0
    %346 = vmatpush1.msra.mxu0 0.0
    %347 = vmatprep.subr.mxu0 0.0
    %348 = vmatpush1.msra.mxu0 0.0
    %349 = vmatprep.subr.mxu0 0.0
    %350 = vmatpush1.msra.mxu0 0.0
    %351 = vmatprep.subr.mxu0 0.0
    %352 = vmatpush1.msra.mxu0 0.0
    %353 = vmatprep.subr.mxu0 0.0
    %354 = vmatpush1.msra.mxu0 0.0
    %355 = vmatprep.subr.mxu0 0.0
    %356 = vmatpush1.msra.mxu0 0.0
    %357 = vmatprep.subr.mxu0 0.0
    %358 = vmatpush1.msra.mxu0 0.0
    %359 = vmatprep.subr.mxu0 0.0
    %360 = vmatpush1.msra.mxu0 0.0
    %361 = vmatprep.subr.mxu0 0.0
    %362 = vmatpush1.msra.mxu0 0.0
    %363 = vmatprep.subr.mxu0 0.0
    %364 = vmatpush1.msra.mxu0 0.0
    %365 = vmatprep.subr.mxu0 0.0
    %366 = vmatpush1.msra.mxu0 0.0
    %367 = vmatprep.subr.mxu0 0.0
    %368 = vmatpush1.msra.mxu0 0.0
    %369 = vmatprep.subr.mxu0 0.0
    %370 = vmatpush1.msra.mxu0 0.0
    %371 = vmatprep.subr.mxu0 0.0
    %372 = vmatpush1.msra.mxu0 0.0
    %373 = vmatprep.mubr.f32.mxu0 0.0
    %374 = vmatmul.mubr.f32.gmra.mrb[0].mxu0 %v286
    %v375 = vpop.f32.mrb[0].mxu0
    %v376 = vadd.f32 %v247, %v375
    %v377 = vpop.f32.mrb[0].mxu0
    %378 = vmatprep.mubr.f32.mxu0 0.0
    %379 = vmatmul.mubr.f32.gmra.mrb[0].mxu0 %v289
    %v380 = vpop.f32.mrb[0].mxu0
    %v381 = vadd.f32 %v252, %v380
    %v382 = vpop.f32.mrb[0].mxu0
    %383 = vmatprep.mubr.f32.mxu0 0.0
    %384 = vmatmul.mubr.f32.gmra.mrb[0].mxu0 %v292
    %v385 = vpop.f32.mrb[0].mxu0
    %v386 = vadd.f32 %v257, %v385
    %v387 = vpop.f32.mrb[0].mxu0
    %388 = vmatprep.mubr.f32.mxu0 0.0
    %389 = vmatmul.mubr.f32.gmra.mrb[0].mxu0 %v295
    %v390 = vpop.f32.mrb[0].mxu0
    %v391 = vadd.f32 %v262, %v390
    %v392 = vpop.f32.mrb[0].mxu0
    %393 = vmatprep.mubr.f32.mxu0 0.0
    %394 = vmatmul.mubr.f32.gmra.mrb[0].mxu0 %v298
    %v395 = vpop.f32.mrb[0].mxu0
    %v396 = vadd.f32 %v267, %v395
    %v397 = vpop.f32.mrb[0].mxu0
    %398 = vmatprep.mubr.f32.mxu0 0.0
    %399 = vmatmul.mubr.f32.gmra.mrb[0].mxu0 %v301
    %v400 = vpop.f32.mrb[0].mxu0
    %v401 = vadd.f32 %v272, %v400
    %v402 = vpop.f32.mrb[0].mxu0
    %403 = vmatprep.mubr.f32.mxu0 0.0
    %404 = vmatmul.mubr.f32.gmra.mrb[0].mxu0 %v304
    %v405 = vpop.f32.mrb[0].mxu0
    %v406 = vadd.f32 %v277, %v405
    %v407 = vpop.f32.mrb[0].mxu0
    %408 = vmatprep.mubr.f32.mxu0 0.0
    %409 = vmatmul.mubr.f32.gmra.mrb[0].mxu0 %v307
    %v410 = vpop.f32.mrb[0].mxu0
    %v411 = vadd.f32 %v282, %v410
    %v412 = vpop.f32.mrb[0].mxu0
    %413 = vdwg.mxu0
    %v414 = vmax.f32 %v376, 0.0
    %v415 = vmax.f32 %v381, 0.0
    %v416 = vmax.f32 %v386, 0.0
    %v417 = vmax.f32 %v391, 0.0
    %v418 = vmax.f32 %v396, 0.0
    %v419 = vmax.f32 %v401, 0.0
    %v420 = vmax.f32 %v406, 0.0
    %v421 = vmax.f32 %v411, 0.0
    %v422 = vld [vmem:[%s5] sm:$0xff]
    %v423 = vld [vmem:[%s5 + $0x8] sm:$0xff]
    %v424 = vld [vmem:[%s5 + $0x10] sm:$0xff]
    %v425 = vld [vmem:[%s5 + $0x18] sm:$0xff]
    %v426 = vld [vmem:[%s5 + $0x20] sm:$0xff]
    %v427 = vld [vmem:[%s5 + $0x28] sm:$0xff]
    %v428 = vld [vmem:[%s5 + $0x30] sm:$0xff]
    %v429 = vld [vmem:[%s5 + $0x38] sm:$0xff]
    %431 = vset.pattern.permute.xlu0 0
    %432 = vperm.xlu0 %431, %v422
    %v433 = vpop.permute.xlu0 %432
    %436 = vset.pattern.permute.xlu0 0
    %437 = vperm.xlu0 %436, %v423
    %v438 = vpop.permute.xlu0 %437
    %441 = vset.pattern.permute.xlu0 0
    %442 = vperm.xlu0 %441, %v424
    %v443 = vpop.permute.xlu0 %442
    %446 = vset.pattern.permute.xlu0 0
    %447 = vperm.xlu0 %446, %v425
    %v448 = vpop.permute.xlu0 %447
    %451 = vset.pattern.permute.xlu0 0
    %452 = vperm.xlu0 %451, %v426
    %v453 = vpop.permute.xlu0 %452
    %456 = vset.pattern.permute.xlu0 0
    %457 = vperm.xlu0 %456, %v427
    %v458 = vpop.permute.xlu0 %457
    %461 = vset.pattern.permute.xlu0 0
    %462 = vperm.xlu0 %461, %v428
    %v463 = vpop.permute.xlu0 %462
    %466 = vset.pattern.permute.xlu0 0
    %467 = vperm.xlu0 %466, %v429
    %v468 = vpop.permute.xlu0 %467
    %v470 = vmul.f32 %v414, %v433
    %v471 = vmul.f32 %v415, %v438
    %v472 = vmul.f32 %v416, %v443
    %v473 = vmul.f32 %v417, %v448
    %v474 = vmul.f32 %v418, %v453
    %v475 = vmul.f32 %v419, %v458
    %v476 = vmul.f32 %v420, %v463
    %v477 = vmul.f32 %v421, %v468
    %v478 = vadd.f32 %v470, %v471
    %v479 = vadd.f32 %v478, %v472
    %v480 = vadd.f32 %v479, %v473
    %v481 = vadd.f32 %v480, %v474
    %v482 = vadd.f32 %v481, %v475
    %v483 = vadd.f32 %v482, %v476
    %v484 = vadd.f32 %v483, %v477
    %v485 = vrot.slane %v484, 4
    %v486 = vadd.f32 %v484, %v485
    %v487 = vrot.slane %v486, 2
    %v488 = vadd.f32 %v486, %v487
    %v489 = vrot.slane %v488, 1
    %v490 = vadd.f32 %v488, %v489
    %v491 = vld [vmem:[#allocation2] sm:$0x1]
    %493 = vset.pattern.permute.xlu0 0
    %494 = vperm.xlu0 %493, %v491
    %v495 = vpop.permute.xlu0 %494
    %v497 = vlaneseq
    %v498 = vshrl.u32 %v497, 7
    %v499 = vsub.s32 0, %v498
    %v500 = vrot.slane %v495, %v499
    %v501 = vadd.f32 %v490, %v500
    %502 = vst [vmem:[#allocation3] sm:$0x1] %v501
    // Predicated region
    $region30: #{tpu_custom_call.1} parent=1 // pred_check
      _
    $region31: #{tpu_custom_call.1} parent=1 // pred_check_branch
      %504 = sbr.rel (0) target = $region33
    $region32: #{tpu_custom_call.1} parent=1 // pred_region
      %s506 = ssub.s32 16, 16
      %507 = vsyncadd [#allocation4], %s506
      %s509 = sshll.u32 [#allocation3], 4
      %s510 = int_to_ptr.vmem [resolvable:$true] %s509
      %512 = dma.vmem_to_hbm [thread:$0]  %s510, 16, %s7, [#allocation4]
    $region33: #{tpu_custom_call.1} parent=1 // pred_fallthru
      _
    // Predicated region
    $region34: #{tpu_custom_call.1} parent=1 // pred_check
      _
    $region35: #{tpu_custom_call.1} parent=1 // pred_check_branch
      %514 = sbr.rel (0) target = $region37
    $region36: #{tpu_custom_call.1} parent=1 // pred_region
      %515 = dma.done [#allocation4], 16
    $region37: #{tpu_custom_call.1} parent=1 // pred_fallthru
      _
    %516 = vsyncpa [#allocation4], 1

</llo_original>
